<compile_context>
chip_gen: v5e
topology: v5e:2x2
jax: 0.10.0
libtpu: 0.0.40
codegen_flags: <defaults>
</compile_context>

<pallas_src>
import functools
import math

import jax
import jax.numpy as jnp
from jax import lax
from jax.experimental import pallas as pl
from jax.experimental.pallas import tpu as pltpu


_INV_SQRT2 = 0.7071067811865476

# Row layout of the packed (5, D) affine/bias operand.
_ROW_ALPHA1, _ROW_BETA1, _ROW_ALPHA2, _ROW_BETA2, _ROW_B2 = range(5)


def _ff_kernel(x_ref, aff_ref, w1_ref, b1_ref, w2_ref, o_ref,
               y_ref, acc_ref, *, approx_gelu):
    """One (tm, D) row tile x one tH-wide hidden chunk of the fused block."""
    k = pl.program_id(1)
    mxu_dtype = w1_ref.dtype

    @pl.when(k == 0)
    def _init():
        # y = alpha1 * x + beta1, kept in f32 scratch: reused as the matmul-1
        # LHS for every hidden chunk and as the residual at write-back.
        y_ref[...] = (aff_ref[_ROW_ALPHA1:_ROW_ALPHA1 + 1, :] * x_ref[...]
                      + aff_ref[_ROW_BETA1:_ROW_BETA1 + 1, :])
        acc_ref[...] = jnp.zeros_like(acc_ref)

    # fc1 chunk (+ bias) -> GELU -> fc2 chunk, accumulated in f32.
    h = jnp.dot(y_ref[...].astype(mxu_dtype), w1_ref[...],
                preferred_element_type=jnp.float32) + b1_ref[...]
    if approx_gelu:
        # Opt-in tanh approximation: moves the transcendental to the EUP slot
        # (diverges slightly from PyTorch's exact-erf GELU).
        h = jax.nn.gelu(h, approximate=True)
    else:
        h = 0.5 * h * (1.0 + lax.erf(h * _INV_SQRT2))
    acc_ref[...] += jnp.dot(h.astype(mxu_dtype), w2_ref[...],
                            preferred_element_type=jnp.float32)

    @pl.when(k == pl.num_programs(1) - 1)
    def _finalize():
        z = acc_ref[...] + aff_ref[_ROW_B2:_ROW_B2 + 1, :]
        o_ref[...] = (aff_ref[_ROW_ALPHA2:_ROW_ALPHA2 + 1, :] * z
                      + aff_ref[_ROW_BETA2:_ROW_BETA2 + 1, :]
                      + y_ref[...]).astype(o_ref.dtype)


def _round_up(a, b):
    return (a + b - 1) // b * b


def _pick_hidden_tile(H, max_th=512):
    """Largest multiple of 128 that divides H and is <= max_th (else full H)."""
    if H <= max_th:
        return H
    th = (max_th // 128) * 128
    while th >= 128:
        if H % th == 0:
            return th
        th -= 128
    return H


def _vmem_capacity_bytes():
    try:
        return int(pltpu.get_tpu_info().vmem_capacity_bytes)
    except Exception:
        # Conservative default == v7x per-TensorCore VMEM.
        return 64 << 20


def feed_forward_pallas(x, params, *, tm=512, mxu_dtype=jnp.bfloat16,
                        approx_gelu=False):
    """x: (..., D) float32.  params: dict (see init_params)."""
    orig_shape = x.shape
    D = orig_shape[-1]
    M = math.prod(orig_shape[:-1])
    H = params["w1"].shape[1]

    # ---- tiling ------------------------------------------------------------
    # Row tile: multiple of 16 (bf16 LHS sublane packing).  No ">=2 grid step"
    # shrink: single-TC v5e/v6e gain nothing and it degrades MXU occupancy.
    tm_eff = min(_round_up(tm, 16), _round_up(M, 16))
    M_pad = _round_up(M, tm_eff)
    tH = _pick_hidden_tile(H)

    x2d = x.reshape(M, D)
    if M_pad != M:
        x2d = jnp.pad(x2d, ((0, M_pad - M), (0, 0)))

    # ---- operands ------------------------------------------------------------
    w1 = params["w1"].astype(mxu_dtype)                       # (D, H)
    w2 = params["w2"].astype(mxu_dtype)                       # (H, D)
    b1 = params["b1"].reshape(1, H).astype(jnp.float32)       # (1, H)
    aff = jnp.concatenate(                                    # (5, D) packed
        [params["alpha1"].reshape(1, D), params["beta1"].reshape(1, D),
         params["alpha2"].reshape(1, D), params["beta2"].reshape(1, D),
         params["b2"].reshape(1, D)], axis=0).astype(jnp.float32)

    w_bytes = jnp.dtype(mxu_dtype).itemsize
    io_bytes = jnp.dtype(x.dtype).itemsize

    # ---- device-aware VMEM budget / cost hint --------------------------------
    vmem_est = (2 * tm_eff * D * io_bytes        # x tile (double-buffered)
                + 2 * tm_eff * D * io_bytes      # out tile
                + 2 * 2 * D * tH * w_bytes       # W1 + W2 hidden slabs
                + 2 * (8 * tH + 8 * D) * 4       # b1 slice + packed affine rows
                + 2 * tm_eff * D * 4             # y + acc scratch
                + tm_eff * tH * 4)               # per-chunk hidden intermediate
    vmem_cap = _vmem_capacity_bytes()
    vmem_limit = int(min(max(vmem_est * 3 // 2, 32 << 20),
                         max(vmem_cap - (12 << 20), 32 << 20)))

    cost = pl.CostEstimate(
        flops=4 * M_pad * D * H,
        transcendentals=M_pad * H,
        bytes_accessed=int(2 * M_pad * D * io_bytes
                           + 2 * D * H * w_bytes + (5 * D + H) * 4),
    )

    grid_spec = pltpu.PrefetchScalarGridSpec(
        num_scalar_prefetch=0,
        grid=(M_pad // tm_eff, H // tH),
        in_specs=[
            pl.BlockSpec((tm_eff, D), lambda i, k: (i, 0)),   # x row tile
            pl.BlockSpec((5, D), lambda i, k: (0, 0)),        # packed aff + b2
            pl.BlockSpec((D, tH), lambda i, k: (0, k)),       # W1 hidden slab
            pl.BlockSpec((1, tH), lambda i, k: (0, k)),       # b1 hidden slice
            pl.BlockSpec((tH, D), lambda i, k: (k, 0)),       # W2 hidden slab
        ],
        out_specs=pl.BlockSpec((tm_eff, D), lambda i, k: (i, 0)),
        scratch_shapes=[pltpu.VMEM((tm_eff, D), jnp.float32),   # y (residual)
                        pltpu.VMEM((tm_eff, D), jnp.float32)],  # f32 accumulator
    )

    out2d = pl.pallas_call(
        functools.partial(_ff_kernel, approx_gelu=approx_gelu),
        out_shape=jax.ShapeDtypeStruct((M_pad, D), x.dtype),
        grid_spec=grid_spec,
        compiler_params=pltpu.CompilerParams(
            dimension_semantics=("parallel", "arbitrary"),
            vmem_limit_bytes=vmem_limit),
        cost_estimate=cost,
    )(x2d, aff, w1, b1, w2)

    if M_pad != M:
        out2d = out2d[:M]
    return out2d.reshape(orig_shape)


def init_params(key, num_features, expansion_factor):
    """Deterministic synthetic parameters matching the PyTorch module shapes."""
    D = num_features
    H = num_features * expansion_factor
    k1, k2, k3, k4 = jax.random.split(key, 4)

    # nn.Linear default init: U(-1/sqrt(fan_in), 1/sqrt(fan_in)).
    lim1 = 1.0 / jnp.sqrt(jnp.float32(D))
    lim2 = 1.0 / jnp.sqrt(jnp.float32(H))
    # PyTorch Linear weight is (out, in); store the transpose (in, out) so the
    # kernel computes row-major x @ W.
    w1 = jax.random.uniform(k1, (D, H), jnp.float32, -lim1, lim1)
    b1 = jax.random.uniform(k2, (1, H), jnp.float32, -lim1, lim1)
    w2 = jax.random.uniform(k3, (H, D), jnp.float32, -lim2, lim2)
    b2 = jax.random.uniform(k4, (1, D), jnp.float32, -lim2, lim2)

    # AffineTransform init: alpha = ones, beta = zeros (as in the module).
    return dict(
        alpha1=jnp.ones((1, D), jnp.float32),
        beta1=jnp.zeros((1, D), jnp.float32),
        w1=w1, b1=b1, w2=w2, b2=b2,
        alpha2=jnp.ones((1, D), jnp.float32),
        beta2=jnp.zeros((1, D), jnp.float32),
    )


def feed_forward_ref(x, p, *, mxu_dtype=jnp.float32):
    """Pure-JAX reference mirroring the PyTorch forward (optionally with the
    same bf16-MXU-operand / f32-accumulate precision the kernel uses)."""
    y = p["alpha1"] * x + p["beta1"]
    res = y
    h = jnp.dot(y.astype(mxu_dtype), p["w1"].astype(mxu_dtype),
                preferred_element_type=jnp.float32) + p["b1"]
    h = 0.5 * h * (1.0 + lax.erf(h * _INV_SQRT2))
    z = jnp.dot(h.astype(mxu_dtype), p["w2"].astype(mxu_dtype),
                preferred_element_type=jnp.float32) + p["b2"]
    return p["alpha2"] * z + p["beta2"] + res


if __name__ == "__main__":
    # Small but lane-dense demo: batch=2, tokens=8, features=128, hidden=512.
    B, S, D, EXP = 2, 8, 128, 4

    key = jax.random.PRNGKey(0)
    kx, kp = jax.random.split(key)
    x = jax.random.normal(kx, (B, S, D), jnp.float32)
    params = init_params(kp, D, EXP)

    out = feed_forward_pallas(x, params, mxu_dtype=jnp.bfloat16)
    out = jax.block_until_ready(out)
    assert out.shape == (B, S, D)

    # Tight check vs a reference using the same bf16-MXU / f32-accumulate
    # precision, plus a loose sanity check vs the exact-f32 PyTorch math.
    ref_same_prec = feed_forward_ref(x, params, mxu_dtype=jnp.bfloat16)
    ref_exact = feed_forward_ref(x, params, mxu_dtype=jnp.float32)
    assert jnp.allclose(out, ref_same_prec, atol=5e-3, rtol=5e-3), \
        "mismatch vs same-precision reference"
    assert jnp.allclose(out, ref_exact, atol=1e-1, rtol=1e-1), \
        "mismatch vs exact f32 reference"

    print("KERNEL_OK")
</pallas_src>

<mosaic_0001>
module attributes {stable_mosaic.version = 11 : i64} {
  func.func @_ff_kernel(%arg0: i32, %arg1: i32, %arg2: memref<16x128xf32, #tpu.memory_space<vmem>>, %arg3: memref<5x128xf32, #tpu.memory_space<vmem>>, %arg4: memref<128x512xbf16, #tpu.memory_space<vmem>>, %arg5: memref<1x512xf32, #tpu.memory_space<vmem>>, %arg6: memref<512x128xbf16, #tpu.memory_space<vmem>>, %arg7: memref<16x128xf32, #tpu.memory_space<vmem>>, %arg8: memref<16x128xf32, #tpu.memory_space<vmem>>, %arg9: memref<16x128xf32, #tpu.memory_space<vmem>>) attributes {dimension_semantics = [#tpu.dimension_semantics<parallel>, #tpu.dimension_semantics<arbitrary>], iteration_bounds = array<i64: 1, 1>, scalar_prefetch = 0 : i64, scratch_operands = 2 : i64, tpu.core_type = #tpu.core_type<tc>, window_params = [{transform_indices = @transform_0, window_bounds = array<i64: 16, 128>}, {pipeline_mode = #tpu.pipeline_mode<synchronous>, transform_indices = @transform_1, window_bounds = array<i64: 5, 128>}, {transform_indices = @transform_2, window_bounds = array<i64: 128, 512>}, {transform_indices = @transform_3, window_bounds = array<i64: 1, 512>}, {transform_indices = @transform_4, window_bounds = array<i64: 512, 128>}, {transform_indices = @transform_5, window_bounds = array<i64: 16, 128>}]} {
    %c0_i32 = arith.constant 0 : i32
    %0 = arith.cmpi eq, %arg1, %c0_i32 : i32
    %1 = arith.extui %0 : i1 to i32
    %c0_i32_0 = arith.constant 0 : i32
    %2 = arith.cmpi ne, %1, %c0_i32_0 : i32
    scf.if %2 {
      %c0_18 = arith.constant 0 : index
      %c0_19 = arith.constant 0 : index
      %27 = vector.load %arg3[%c0_18, %c0_19] : memref<5x128xf32, #tpu.memory_space<vmem>>, vector<1x128xf32>
      %c0_20 = arith.constant 0 : index
      %c0_21 = arith.constant 0 : index
      %28 = vector.load %arg2[%c0_20, %c0_21] : memref<16x128xf32, #tpu.memory_space<vmem>>, vector<16x128xf32>
      %29 = vector.broadcast %27 : vector<1x128xf32> to vector<16x128xf32>
      %30 = arith.mulf %29, %28 : vector<16x128xf32>
      %c1 = arith.constant 1 : index
      %c0_22 = arith.constant 0 : index
      %31 = vector.load %arg3[%c1, %c0_22] : memref<5x128xf32, #tpu.memory_space<vmem>>, vector<1x128xf32>
      %32 = vector.broadcast %31 : vector<1x128xf32> to vector<16x128xf32>
      %33 = arith.addf %30, %32 : vector<16x128xf32>
      %c0_23 = arith.constant 0 : index
      %c0_24 = arith.constant 0 : index
      %34 = vector.load %arg8[%c0_23, %c0_24] : memref<16x128xf32, #tpu.memory_space<vmem>>, vector<16x128xf32>
      tpu.vector_store %arg8[%c0_23, %c0_24], %33 {strides = array<i32>} : memref<16x128xf32, #tpu.memory_space<vmem>>, vector<16x128xf32>,
      %cst_25 = arith.constant 0.000000e+00 : f32
      %35 = vector.broadcast %cst_25 : f32 to vector<16x128xf32>
      %c0_26 = arith.constant 0 : index
      %c0_27 = arith.constant 0 : index
      %36 = vector.load %arg9[%c0_26, %c0_27] : memref<16x128xf32, #tpu.memory_space<vmem>>, vector<16x128xf32>
      tpu.vector_store %arg9[%c0_26, %c0_27], %35 {strides = array<i32>} : memref<16x128xf32, #tpu.memory_space<vmem>>, vector<16x128xf32>,
    } else {
    }
    %c0 = arith.constant 0 : index
    %c0_1 = arith.constant 0 : index
    %3 = vector.load %arg8[%c0, %c0_1] : memref<16x128xf32, #tpu.memory_space<vmem>>, vector<16x128xf32>
    %4 = arith.truncf %3 : vector<16x128xf32> to vector<16x128xbf16>
    %c0_2 = arith.constant 0 : index
    %c0_3 = arith.constant 0 : index
    %5 = vector.load %arg4[%c0_2, %c0_3] : memref<128x512xbf16, #tpu.memory_space<vmem>>, vector<128x512xbf16>
    %cst = arith.constant dense<0.000000e+00> : vector<16x512xf32>
    %6 = tpu.matmul %4, %5, %cst {dimension_numbers = #tpu.dot_dimension_numbers<[1], [0], [0], [1], [0, 0, 1, 1], [], []>} : vector<16x128xbf16>, vector<128x512xbf16>, vector<16x512xf32> -> vector<16x512xf32>
    %c0_4 = arith.constant 0 : index
    %c0_5 = arith.constant 0 : index
    %7 = vector.load %arg5[%c0_4, %c0_5] : memref<1x512xf32, #tpu.memory_space<vmem>>, vector<1x512xf32>
    %8 = vector.broadcast %7 : vector<1x512xf32> to vector<16x512xf32>
    %9 = arith.addf %6, %8 : vector<16x512xf32>
    %cst_6 = arith.constant 5.000000e-01 : f32
    %10 = vector.broadcast %cst_6 : f32 to vector<16x512xf32>
    %11 = arith.mulf %10, %9 : vector<16x512xf32>
    %cst_7 = arith.constant 0.707106769 : f32
    %12 = vector.broadcast %cst_7 : f32 to vector<16x512xf32>
    %13 = arith.mulf %9, %12 : vector<16x512xf32>
    %14 = math.erf %13 : vector<16x512xf32>
    %cst_8 = arith.constant 1.000000e+00 : f32
    %15 = vector.broadcast %cst_8 : f32 to vector<16x512xf32>
    %16 = arith.addf %15, %14 : vector<16x512xf32>
    %17 = arith.mulf %11, %16 : vector<16x512xf32>
    %c0_9 = arith.constant 0 : index
    %c0_10 = arith.constant 0 : index
    %18 = vector.load %arg9[%c0_9, %c0_10] : memref<16x128xf32, #tpu.memory_space<vmem>>, vector<16x128xf32>
    %19 = arith.truncf %17 : vector<16x512xf32> to vector<16x512xbf16>
    %c0_11 = arith.constant 0 : index
    %c0_12 = arith.constant 0 : index
    %20 = vector.load %arg6[%c0_11, %c0_12] : memref<512x128xbf16, #tpu.memory_space<vmem>>, vector<512x128xbf16>
    %cst_13 = arith.constant dense<0.000000e+00> : vector<16x128xf32>
    %21 = tpu.matmul %19, %20, %cst_13 {dimension_numbers = #tpu.dot_dimension_numbers<[1], [0], [0], [1], [0, 0, 1, 1], [], []>} : vector<16x512xbf16>, vector<512x128xbf16>, vector<16x128xf32> -> vector<16x128xf32>
    %22 = arith.addf %18, %21 : vector<16x128xf32>
    %c0_14 = arith.constant 0 : index
    %c0_15 = arith.constant 0 : index
    %23 = vector.load %arg9[%c0_14, %c0_15] : memref<16x128xf32, #tpu.memory_space<vmem>>, vector<16x128xf32>
    tpu.vector_store %arg9[%c0_14, %c0_15], %22 {strides = array<i32>} : memref<16x128xf32, #tpu.memory_space<vmem>>, vector<16x128xf32>,
    %c0_i32_16 = arith.constant 0 : i32
    %24 = arith.cmpi eq, %arg1, %c0_i32_16 : i32
    %25 = arith.extui %24 : i1 to i32
    %c0_i32_17 = arith.constant 0 : i32
    %26 = arith.cmpi ne, %25, %c0_i32_17 : i32
    scf.if %26 {
      %c0_18 = arith.constant 0 : index
      %c0_19 = arith.constant 0 : index
      %27 = vector.load %arg9[%c0_18, %c0_19] : memref<16x128xf32, #tpu.memory_space<vmem>>, vector<16x128xf32>
      %c4 = arith.constant 4 : index
      %c0_20 = arith.constant 0 : index
      %28 = vector.load %arg3[%c4, %c0_20] : memref<5x128xf32, #tpu.memory_space<vmem>>, vector<1x128xf32>
      %29 = vector.broadcast %28 : vector<1x128xf32> to vector<16x128xf32>
      %30 = arith.addf %27, %29 : vector<16x128xf32>
      %c2 = arith.constant 2 : index
      %c0_21 = arith.constant 0 : index
      %31 = vector.load %arg3[%c2, %c0_21] : memref<5x128xf32, #tpu.memory_space<vmem>>, vector<1x128xf32>
      %32 = vector.broadcast %31 : vector<1x128xf32> to vector<16x128xf32>
      %33 = arith.mulf %32, %30 : vector<16x128xf32>
      %c3 = arith.constant 3 : index
      %c0_22 = arith.constant 0 : index
      %34 = vector.load %arg3[%c3, %c0_22] : memref<5x128xf32, #tpu.memory_space<vmem>>, vector<1x128xf32>
      %35 = vector.broadcast %34 : vector<1x128xf32> to vector<16x128xf32>
      %36 = arith.addf %33, %35 : vector<16x128xf32>
      %c0_23 = arith.constant 0 : index
      %c0_24 = arith.constant 0 : index
      %37 = vector.load %arg8[%c0_23, %c0_24] : memref<16x128xf32, #tpu.memory_space<vmem>>, vector<16x128xf32>
      %38 = arith.addf %36, %37 : vector<16x128xf32>
      %c0_25 = arith.constant 0 : index
      %c0_26 = arith.constant 0 : index
      %39 = vector.load %arg7[%c0_25, %c0_26] : memref<16x128xf32, #tpu.memory_space<vmem>>, vector<16x128xf32>
      tpu.vector_store %arg7[%c0_25, %c0_26], %38 {strides = array<i32>} : memref<16x128xf32, #tpu.memory_space<vmem>>, vector<16x128xf32>,
    } else {
    }
    return
  }
  func.func @transform_0(%arg0: i32, %arg1: i32) -> (i32, i32) {
    %c0_i32 = arith.constant 0 : i32
    %c0_i32_0 = arith.constant 0 : i32
    return %arg0, %c0_i32 : i32, i32
  }
  func.func @transform_1(%arg0: i32, %arg1: i32) -> (i32, i32) {
    %c0_i32 = arith.constant 0 : i32
    %c0_i32_0 = arith.constant 0 : i32
    %c0_i32_1 = arith.constant 0 : i32
    return %c0_i32, %c0_i32_0 : i32, i32
  }
  func.func @transform_2(%arg0: i32, %arg1: i32) -> (i32, i32) {
    %c0_i32 = arith.constant 0 : i32
    %c0_i32_0 = arith.constant 0 : i32
    return %c0_i32, %arg1 : i32, i32
  }
  func.func @transform_3(%arg0: i32, %arg1: i32) -> (i32, i32) {
    %c0_i32 = arith.constant 0 : i32
    %c0_i32_0 = arith.constant 0 : i32
    return %c0_i32, %arg1 : i32, i32
  }
  func.func @transform_4(%arg0: i32, %arg1: i32) -> (i32, i32) {
    %c0_i32 = arith.constant 0 : i32
    %c0_i32_0 = arith.constant 0 : i32
    return %arg1, %c0_i32 : i32, i32
  }
  func.func @transform_5(%arg0: i32, %arg1: i32) -> (i32, i32) {
    %c0_i32 = arith.constant 0 : i32
    %c0_i32_0 = arith.constant 0 : i32
    return %arg0, %c0_i32 : i32, i32
  }
}

</mosaic_0001>

<llo_original>
// kernel: tpu_custom_call.1
$region0: #{tpu_custom_call.1}
  #allocation0 [shape = 'u32[]', space=smem, size = 0x4, offset = 0x4, fixed_abs, tag = 'smem constant byte address 0x4 - core index']
  #allocation1 [shape = 'u32[72,128]{1,0:T(1,128)}', space=vmem, size = 0x9000, scoped, tag = 'internal scratch']
  #allocation2 [shape = 'f32[16,128]{1,0:T(8,128)}', space=vmem, size = 0x2000, scoped, tag = 'scratch operand']
  #allocation3 [shape = 'f32[16,128]{1,0:T(8,128)}', space=vmem, size = 0x2000, scoped, tag = 'scratch operand']
  %s0 = inlined_call_operand.hbm [shape: f32[16,128], index: 0, kind: input, shape index: {}]
  %s1 = inlined_call_operand.hbm [shape: f32[5,128], index: 1, kind: input, shape index: {}]
  %s2 = inlined_call_operand.hbm [shape: bf16[128,512], index: 2, kind: input, shape index: {}]
  %s3 = inlined_call_operand.hbm [shape: f32[1,512], index: 3, kind: input, shape index: {}]
  %s4 = inlined_call_operand.hbm [shape: bf16[512,128], index: 4, kind: input, shape index: {}]
  %s5 = inlined_call_operand.hbm [shape: f32[16,128], index: 5, kind: output, shape index: {}]
  %s6 = sld [smem:[#allocation0]]
  $region58: #{tpu_custom_call.1} parent=0
    _
  %s8 = ssub.s32 1, %s6
  %s9 = scalar_select 0, %s8, %s6
  $region1: #{tpu_custom_call.1} parent=0
    #allocation4 [shape = 'u8[8192]{0}', space=vmem, size = 0x2000, scoped, tag = 'input window, operand 0, single buffered']
    #allocation5 [shape = 's32[1]{0}', space=sflag, size = 0x4, scoped, tag = 'scoped memory for tpu_custom_call.1']
    #allocation6 [shape = 's32[1]{0}', space=sflag, size = 0x4, scoped, tag = 'scoped memory for tpu_custom_call.1']
    #allocation7 [shape = 'u8[4096]{0}', space=vmem, size = 0x1000, scoped, tag = 'input window, operand 1, single buffered']
    #allocation8 [shape = 's32[1]{0}', space=sflag, size = 0x4, scoped, tag = 'scoped memory for tpu_custom_call.1']
    #allocation9 [shape = 'u8[131072]{0}', space=vmem, size = 0x20000, scoped, tag = 'input window, operand 2, single buffered']
    #allocation10 [shape = 'u8[2048]{0}', space=vmem, size = 0x800, scoped, tag = 'input window, operand 3, single buffered']
    #allocation11 [shape = 's32[1]{0}', space=sflag, size = 0x4, scoped, tag = 'scoped memory for tpu_custom_call.1']
    #allocation12 [shape = 'u8[131072]{0}', space=vmem, size = 0x20000, scoped, tag = 'input window, operand 4, single buffered']
    #allocation13 [shape = 'u8[8192]{0}', space=vmem, size = 0x2000, scoped, tag = 'output window, operand 0, single buffered']
    %10 = vsyncpa [#allocation5], 0
    %11 = vsyncpa [#allocation8], 0
    %12 = vsyncpa [#allocation11], 0
    %13 = vsyncpa [#allocation6], 0
    // Predicated region
    $region2: #{tpu_custom_call.1} parent=1 // pred_check
      _
    $region3: #{tpu_custom_call.1} parent=1 // pred_check_branch
      %15 = sbr.rel (0) target = $region5
    $region4: #{tpu_custom_call.1} parent=1 // pred_region
      %17 = vsyncadd [#allocation5], 0
      %s18 = sshll.u32 %s0, 4
      %s19 = int_to_ptr.hbm [resolvable:$true] %s18
      %s20 = sshll.u32 [#allocation4], 4
      %s21 = int_to_ptr.vmem [resolvable:$true] %s20
      %26 = dma.hbm_to_vmem [thread:$0]  %s19, 256, %s21, [#allocation5], 128, 128, 8
    $region5: #{tpu_custom_call.1} parent=1 // pred_fallthru
      _
    // Predicated region
    $region6: #{tpu_custom_call.1} parent=1 // pred_check
      _
    $region7: #{tpu_custom_call.1} parent=1 // pred_check_branch
      %28 = sbr.rel (0) target = $region9
    $region8: #{tpu_custom_call.1} parent=1 // pred_region
      %30 = vsyncadd [#allocation8], 0
      %s32 = sshll.u32 %s1, 4
      %s33 = int_to_ptr.hbm [resolvable:$true] %s32
      %s34 = sshll.u32 [#allocation7], 4
      %s35 = int_to_ptr.vmem [resolvable:$true] %s34
      %37 = dma.hbm_to_vmem [thread:$0]  %s33, 128, %s35, [#allocation8]
    $region9: #{tpu_custom_call.1} parent=1 // pred_fallthru
      _
    // Predicated region
    $region10: #{tpu_custom_call.1} parent=1 // pred_check
      _
    $region11: #{tpu_custom_call.1} parent=1 // pred_check_branch
      %39 = sbr.rel (0) target = $region13
    $region12: #{tpu_custom_call.1} parent=1 // pred_region
      %41 = vsyncadd [#allocation8], 0
      %s42 = sshll.u32 %s2, 4
      %s43 = int_to_ptr.hbm [resolvable:$true] %s42
      %s44 = sshll.u32 [#allocation9], 4
      %s45 = int_to_ptr.vmem [resolvable:$true] %s44
      %50 = dma.hbm_to_vmem [thread:$0]  %s43, 4096, %s45, [#allocation8], 256, 256, 16
    $region13: #{tpu_custom_call.1} parent=1 // pred_fallthru
      _
    // Predicated region
    $region14: #{tpu_custom_call.1} parent=1 // pred_check
      _
    $region15: #{tpu_custom_call.1} parent=1 // pred_check_branch
      %52 = sbr.rel (0) target = $region17
    $region16: #{tpu_custom_call.1} parent=1 // pred_region
      %54 = vsyncadd [#allocation11], 0
      %s56 = sshll.u32 %s3, 4
      %s57 = int_to_ptr.hbm [resolvable:$true] %s56
      %s58 = sshll.u32 [#allocation10], 4
      %s59 = int_to_ptr.vmem [resolvable:$true] %s58
      %61 = dma.hbm_to_vmem [thread:$0]  %s57, 64, %s59, [#allocation11]
    $region17: #{tpu_custom_call.1} parent=1 // pred_fallthru
      _
    // Predicated region
    $region18: #{tpu_custom_call.1} parent=1 // pred_check
      _
    $region19: #{tpu_custom_call.1} parent=1 // pred_check_branch
      %63 = sbr.rel (0) target = $region21
    $region20: #{tpu_custom_call.1} parent=1 // pred_region
      %65 = vsyncadd [#allocation11], 0
      %s66 = sshll.u32 %s4, 4
      %s67 = int_to_ptr.hbm [resolvable:$true] %s66
      %s68 = sshll.u32 [#allocation12], 4
      %s69 = int_to_ptr.vmem [resolvable:$true] %s68
      %74 = dma.hbm_to_vmem [thread:$0]  %s67, 4096, %s69, [#allocation11], 64, 64, 4
    $region21: #{tpu_custom_call.1} parent=1 // pred_fallthru
      _
    // Predicated region
    $region22: #{tpu_custom_call.1} parent=1 // pred_check
      _
    $region23: #{tpu_custom_call.1} parent=1 // pred_check_branch
      %76 = sbr.rel (0) target = $region25
    $region24: #{tpu_custom_call.1} parent=1 // pred_region
      %78 = dma.done [#allocation5], 256
    $region25: #{tpu_custom_call.1} parent=1 // pred_fallthru
      _
    // Predicated region
    $region26: #{tpu_custom_call.1} parent=1 // pred_check
      _
    $region27: #{tpu_custom_call.1} parent=1 // pred_check_branch
      %80 = sbr.rel (0) target = $region29
    $region28: #{tpu_custom_call.1} parent=1 // pred_region
      %82 = dma.done [#allocation8], 128
    $region29: #{tpu_custom_call.1} parent=1 // pred_fallthru
      _
    // Predicated region
    $region30: #{tpu_custom_call.1} parent=1 // pred_check
      _
    $region31: #{tpu_custom_call.1} parent=1 // pred_check_branch
      %84 = sbr.rel (0) target = $region33
    $region32: #{tpu_custom_call.1} parent=1 // pred_region
      %86 = dma.done [#allocation8], 4096
    $region33: #{tpu_custom_call.1} parent=1 // pred_fallthru
      _
    // Predicated region
    $region34: #{tpu_custom_call.1} parent=1 // pred_check
      _
    $region35: #{tpu_custom_call.1} parent=1 // pred_check_branch
      %88 = sbr.rel (0) target = $region37
    $region36: #{tpu_custom_call.1} parent=1 // pred_region
      %90 = dma.done [#allocation11], 64
    $region37: #{tpu_custom_call.1} parent=1 // pred_fallthru
      _
    // Predicated region
    $region38: #{tpu_custom_call.1} parent=1 // pred_check
      _
    $region39: #{tpu_custom_call.1} parent=1 // pred_check_branch
      %92 = sbr.rel (0) target = $region41
    $region40: #{tpu_custom_call.1} parent=1 // pred_region
      %94 = dma.done [#allocation11], 4096
    $region41: #{tpu_custom_call.1} parent=1 // pred_fallthru
      _
    %p95 = scmp.eq.s32.totalorder 0, 0
    // Predicated region
    $region42: #{tpu_custom_call.1} parent=1 // pred_check
      %p96 = pneg %p95
    $region43: #{tpu_custom_call.1} parent=1 // pred_check_branch
      %98 = sbr.rel (%p96) target = $region45
    $region44: #{tpu_custom_call.1} parent=1 // pred_region
      %v99 = vld [vmem:[#allocation7] sm:$0x1]
      %v100 = vld [vmem:[#allocation4] sm:$0xff]
      %v101 = vld [vmem:[#allocation4 + $0x8] sm:$0xff]
      %v102 = vperm.slane %v99, 0
      %v103 = vmul.f32 %v102, %v100
      %v104 = vmul.f32 %v102, %v101
      %v105 = vld [vmem:[#allocation7 + $0x1] sm:$0x1]
      %v106 = vperm.slane %v105, 0
      %v107 = vadd.f32 %v103, %v106
      %v108 = vadd.f32 %v104, %v106
      %109 = vst [vmem:[#allocation2] sm:$0xff] %v107
      %110 = vst [vmem:[#allocation2 + $0x8] sm:$0xff] %v108
      %111 = vst [vmem:[#allocation3] sm:$0xff] 0.0
      %112 = vst [vmem:[#allocation3 + $0x8] sm:$0xff] 0.0
    $region45: #{tpu_custom_call.1} parent=1 // pred_fallthru
      _
    %v113 = vld [vmem:[#allocation2] sm:$0xff]
    %v114 = vld [vmem:[#allocation2 + $0x8] sm:$0xff]
    %v115 = vpack.c.bf16 %v114, %v113
    %v116 = vld [vmem:[#allocation9] sm:$0xff]
    %v117 = vld [vmem:[#allocation9 + $0x8] sm:$0xff]
    %v118 = vld [vmem:[#allocation9 + $0x10] sm:$0xff]
    %v119 = vld [vmem:[#allocation9 + $0x18] sm:$0xff]
    %v120 = vld [vmem:[#allocation9 + $0x20] sm:$0xff]
    %v121 = vld [vmem:[#allocation9 + $0x28] sm:$0xff]
    %v122 = vld [vmem:[#allocation9 + $0x30] sm:$0xff]
    %v123 = vld [vmem:[#allocation9 + $0x38] sm:$0xff]
    %v124 = vld [vmem:[#allocation9 + $0x40] sm:$0xff]
    %v125 = vld [vmem:[#allocation9 + $0x48] sm:$0xff]
    %v126 = vld [vmem:[#allocation9 + $0x50] sm:$0xff]
    %v127 = vld [vmem:[#allocation9 + $0x58] sm:$0xff]
    %v128 = vld [vmem:[#allocation9 + $0x60] sm:$0xff]
    %v129 = vld [vmem:[#allocation9 + $0x68] sm:$0xff]
    %v130 = vld [vmem:[#allocation9 + $0x70] sm:$0xff]
    %v131 = vld [vmem:[#allocation9 + $0x78] sm:$0xff]
    %v132 = vld [vmem:[#allocation9 + $0x80] sm:$0xff]
    %v133 = vld [vmem:[#allocation9 + $0x88] sm:$0xff]
    %v134 = vld [vmem:[#allocation9 + $0x90] sm:$0xff]
    %v135 = vld [vmem:[#allocation9 + $0x98] sm:$0xff]
    %v136 = vld [vmem:[#allocation9 + $0xa0] sm:$0xff]
    %v137 = vld [vmem:[#allocation9 + $0xa8] sm:$0xff]
    %v138 = vld [vmem:[#allocation9 + $0xb0] sm:$0xff]
    %v139 = vld [vmem:[#allocation9 + $0xb8] sm:$0xff]
    %v140 = vld [vmem:[#allocation9 + $0xc0] sm:$0xff]
    %v141 = vld [vmem:[#allocation9 + $0xc8] sm:$0xff]
    %v142 = vld [vmem:[#allocation9 + $0xd0] sm:$0xff]
    %v143 = vld [vmem:[#allocation9 + $0xd8] sm:$0xff]
    %v144 = vld [vmem:[#allocation9 + $0xe0] sm:$0xff]
    %v145 = vld [vmem:[#allocation9 + $0xe8] sm:$0xff]
    %v146 = vld [vmem:[#allocation9 + $0xf0] sm:$0xff]
    %v147 = vld [vmem:[#allocation9 + $0xf8] sm:$0xff]
    %v148 = vld [vmem:[#allocation10] sm:$0xf]
    %v150 = vperm.slane %v148, 0
    %v151 = vperm.slane %v148, 1
    %v152 = vperm.slane %v148, 2
    %v153 = vperm.slane %v148, 3
    %v190 = vunpack.c.l.b16 %v116
    %v191 = vunpack.c.h.b16 %v116
    %v192 = vunpack.c.l.b16 %v117
    %v193 = vunpack.c.h.b16 %v117
    %v194 = vunpack.c.l.b16 %v118
    %v195 = vunpack.c.h.b16 %v118
    %v196 = vunpack.c.l.b16 %v119
    %v197 = vunpack.c.h.b16 %v119
    %v198 = vunpack.c.l.b16 %v120
    %v199 = vunpack.c.h.b16 %v120
    %v200 = vunpack.c.l.b16 %v121
    %v201 = vunpack.c.h.b16 %v121
    %v202 = vunpack.c.l.b16 %v122
    %v203 = vunpack.c.h.b16 %v122
    %v204 = vunpack.c.l.b16 %v123
    %v205 = vunpack.c.h.b16 %v123
    %v206 = vunpack.c.l.b16 %v124
    %v207 = vunpack.c.h.b16 %v124
    %v208 = vunpack.c.l.b16 %v125
    %v209 = vunpack.c.h.b16 %v125
    %v210 = vunpack.c.l.b16 %v126
    %v211 = vunpack.c.h.b16 %v126
    %v212 = vunpack.c.l.b16 %v127
    %v213 = vunpack.c.h.b16 %v127
    %v214 = vunpack.c.l.b16 %v128
    %v215 = vunpack.c.h.b16 %v128
    %v216 = vunpack.c.l.b16 %v129
    %v217 = vunpack.c.h.b16 %v129
    %v218 = vunpack.c.l.b16 %v130
    %v219 = vunpack.c.h.b16 %v130
    %v220 = vunpack.c.l.b16 %v131
    %v221 = vunpack.c.h.b16 %v131
    %v222 = vunpack.c.l.b16 %v132
    %v223 = vunpack.c.h.b16 %v132
    %v224 = vunpack.c.l.b16 %v133
    %v225 = vunpack.c.h.b16 %v133
    %v226 = vunpack.c.l.b16 %v134
    %v227 = vunpack.c.h.b16 %v134
    %v228 = vunpack.c.l.b16 %v135
    %v229 = vunpack.c.h.b16 %v135
    %v230 = vunpack.c.l.b16 %v136
    %v231 = vunpack.c.h.b16 %v136
    %v232 = vunpack.c.l.b16 %v137
    %v233 = vunpack.c.h.b16 %v137
    %v234 = vunpack.c.l.b16 %v138
    %v235 = vunpack.c.h.b16 %v138
    %v236 = vunpack.c.l.b16 %v139
    %v237 = vunpack.c.h.b16 %v139
    %v238 = vunpack.c.l.b16 %v140
    %v239 = vunpack.c.h.b16 %v140
    %v240 = vunpack.c.l.b16 %v141
    %v241 = vunpack.c.h.b16 %v141
    %v242 = vunpack.c.l.b16 %v142
    %v243 = vunpack.c.h.b16 %v142
    %v244 = vunpack.c.l.b16 %v143
    %v245 = vunpack.c.h.b16 %v143
    %v246 = vunpack.c.l.b16 %v144
    %v247 = vunpack.c.h.b16 %v144
    %v248 = vunpack.c.l.b16 %v145
    %v249 = vunpack.c.h.b16 %v145
    %v250 = vunpack.c.l.b16 %v146
    %v251 = vunpack.c.h.b16 %v146
    %v252 = vunpack.c.l.b16 %v147
    %v253 = vunpack.c.h.b16 %v147
    %v254 = vpack.c.b16 %v194, %v190
    %v255 = vpack.c.b16 %v195, %v191
    %v256 = vpack.c.b16 %v196, %v192
    %v257 = vpack.c.b16 %v197, %v193
    %v258 = vpack.c.b16 %v202, %v198
    %v259 = vpack.c.b16 %v203, %v199
    %v260 = vpack.c.b16 %v204, %v200
    %v261 = vpack.c.b16 %v205, %v201
    %v262 = vpack.c.b16 %v210, %v206
    %v263 = vpack.c.b16 %v211, %v207
    %v264 = vpack.c.b16 %v212, %v208
    %v265 = vpack.c.b16 %v213, %v209
    %v266 = vpack.c.b16 %v218, %v214
    %v267 = vpack.c.b16 %v219, %v215
    %v268 = vpack.c.b16 %v220, %v216
    %v269 = vpack.c.b16 %v221, %v217
    %v270 = vpack.c.b16 %v226, %v222
    %v271 = vpack.c.b16 %v227, %v223
    %v272 = vpack.c.b16 %v228, %v224
    %v273 = vpack.c.b16 %v229, %v225
    %v274 = vpack.c.b16 %v234, %v230
    %v275 = vpack.c.b16 %v235, %v231
    %v276 = vpack.c.b16 %v236, %v232
    %v277 = vpack.c.b16 %v237, %v233
    %v278 = vpack.c.b16 %v242, %v238
    %v279 = vpack.c.b16 %v243, %v239
    %v280 = vpack.c.b16 %v244, %v240
    %v281 = vpack.c.b16 %v245, %v241
    %v282 = vpack.c.b16 %v250, %v246
    %v283 = vpack.c.b16 %v251, %v247
    %v284 = vpack.c.b16 %v252, %v248
    %v285 = vpack.c.b16 %v253, %v249
    %318 = vmatpush.bf16.msra.mxu0 %v282
    %319 = vmatpush.bf16.msra.mxu0 %v278
    %320 = vmatpush.bf16.msra.mxu0 %v274
    %321 = vmatpush.bf16.msra.mxu0 %v270
    %322 = vmatpush.bf16.msra.mxu0 %v266
    %323 = vmatpush.bf16.msra.mxu0 %v262
    %324 = vmatpush.bf16.msra.mxu0 %v258
    %325 = vmatpush.bf16.msra.mxu0 %v254
    %326 = vmatmul.bf16.gmra.mxu0 %v115
    %v327 = vpop.f32.mrf.mxu0
    %v328 = vadd.f32 %v150, %v327
    %v329 = vpop.f32.mrf.mxu0
    %v330 = vadd.f32 %v150, %v329
    %331 = vdwg.mxu0
    %332 = vmatpush.bf16.msra.mxu0 %v283
    %333 = vmatpush.bf16.msra.mxu0 %v279
    %334 = vmatpush.bf16.msra.mxu0 %v275
    %335 = vmatpush.bf16.msra.mxu0 %v271
    %336 = vmatpush.bf16.msra.mxu0 %v267
    %337 = vmatpush.bf16.msra.mxu0 %v263
    %338 = vmatpush.bf16.msra.mxu0 %v259
    %339 = vmatpush.bf16.msra.mxu0 %v255
    %340 = vmatmul.bf16.gmra.mxu0 %v115
    %v341 = vpop.f32.mrf.mxu0
    %v342 = vadd.f32 %v151, %v341
    %v343 = vpop.f32.mrf.mxu0
    %v344 = vadd.f32 %v151, %v343
    %345 = vdwg.mxu0
    %346 = vmatpush.bf16.msra.mxu0 %v284
    %347 = vmatpush.bf16.msra.mxu0 %v280
    %348 = vmatpush.bf16.msra.mxu0 %v276
    %349 = vmatpush.bf16.msra.mxu0 %v272
    %350 = vmatpush.bf16.msra.mxu0 %v268
    %351 = vmatpush.bf16.msra.mxu0 %v264
    %352 = vmatpush.bf16.msra.mxu0 %v260
    %353 = vmatpush.bf16.msra.mxu0 %v256
    %354 = vmatmul.bf16.gmra.mxu0 %v115
    %v355 = vpop.f32.mrf.mxu0
    %v356 = vadd.f32 %v152, %v355
    %v357 = vpop.f32.mrf.mxu0
    %v358 = vadd.f32 %v152, %v357
    %359 = vdwg.mxu0
    %360 = vmatpush.bf16.msra.mxu0 %v285
    %361 = vmatpush.bf16.msra.mxu0 %v281
    %362 = vmatpush.bf16.msra.mxu0 %v277
    %363 = vmatpush.bf16.msra.mxu0 %v273
    %364 = vmatpush.bf16.msra.mxu0 %v269
    %365 = vmatpush.bf16.msra.mxu0 %v265
    %366 = vmatpush.bf16.msra.mxu0 %v261
    %367 = vmatpush.bf16.msra.mxu0 %v257
    %368 = vmatmul.bf16.gmra.mxu0 %v115
    %v369 = vpop.f32.mrf.mxu0
    %v370 = vadd.f32 %v153, %v369
    %v371 = vpop.f32.mrf.mxu0
    %v372 = vadd.f32 %v153, %v371
    %373 = vdwg.mxu0
    %v374 = vmul.f32 %v328, 0.5
    %v375 = vmul.f32 %v342, 0.5
    %v376 = vmul.f32 %v356, 0.5
    %v377 = vmul.f32 %v370, 0.5
    %v378 = vmul.f32 %v330, 0.5
    %v379 = vmul.f32 %v344, 0.5
    %v380 = vmul.f32 %v358, 0.5
    %v381 = vmul.f32 %v372, 0.5
    %v382 = vmul.f32 %v328, 0.70710677
    %v383 = vmul.f32 %v342, 0.70710677
    %v384 = vmul.f32 %v356, 0.70710677
    %v385 = vmul.f32 %v370, 0.70710677
    %v386 = vmul.f32 %v330, 0.70710677
    %v387 = vmul.f32 %v344, 0.70710677
    %v388 = vmul.f32 %v358, 0.70710677
    %v389 = vmul.f32 %v372, 0.70710677
    %v390 = vmul.f32 %v382, %v382
    %v391 = vmin.f32 16.0, %v390
    %v392 = vmul.f32 %v391, 2.1237322e-06
    %v393 = vadd.f32 %v392, 0.00028619796
    %v394 = vmul.f32 %v391, %v393
    %v395 = vadd.f32 %v394, 0.0036580483
    %v396 = vmul.f32 %v391, %v395
    %v397 = vadd.f32 %v396, 0.05243302
    %v398 = vmul.f32 %v391, %v397
    %v399 = vadd.f32 %v398, 0.18741608
    %v400 = vmul.f32 %v391, %v399
    %v401 = vadd.f32 %v400, 1.1283791
    %v402 = vmul.f32 %v382, %v401
    %v403 = vmul.f32 %v391, 3.8918573e-05
    %v404 = vadd.f32 %v403, 0.001143296
    %v405 = vmul.f32 %v391, %v404
    %v406 = vadd.f32 %v405, 0.014752088
    %v407 = vmul.f32 %v391, %v406
    %v408 = vadd.f32 %v407, 0.112945676
    %v409 = vmul.f32 %v391, %v408
    %v410 = vadd.f32 %v409, 0.4994258
    %v411 = vmul.f32 %v391, %v410
    %v412 = vadd.f32 %v411, 1.0
    %v413 = vrcp.pop %v412
    %v414 = vmul.f32 %v412, %v413
    %v415 = vsub.f32 1.0, %v414
    %v416 = vmul.f32 %v413, %v415
    %v417 = vadd.f32 %v413, %v416
    %vm418 = vweird.f32 %v412
    %vm419 = vweird.f32 %v413
    %vm420 = vmor %vm418, %vm419
    %v421 = vsel %vm420, %v413, %v417
    %v422 = vand.u32 2147483647, %v412
    %vm423 = vcmp.eq.f32.partialorder %v422, 8.507059e+37
    %v424 = vand.u32 %v412, 2147483648
    %v425 = vor.u32 1.1754944e-38, %v424
    %v426 = vsel %vm423, %v425, %v421
    %v427 = vmul.f32 %v402, %v426
    %v428 = vmin.f32 %v427, 1.0
    %v429 = vmax.f32 %v428, -1.0
    %v430 = vmul.f32 %v383, %v383
    %v431 = vmin.f32 16.0, %v430
    %v432 = vmul.f32 %v431, 2.1237322e-06
    %v433 = vadd.f32 %v432, 0.00028619796
    %v434 = vmul.f32 %v431, %v433
    %v435 = vadd.f32 %v434, 0.0036580483
    %v436 = vmul.f32 %v431, %v435
    %v437 = vadd.f32 %v436, 0.05243302
    %v438 = vmul.f32 %v431, %v437
    %v439 = vadd.f32 %v438, 0.18741608
    %v440 = vmul.f32 %v431, %v439
    %v441 = vadd.f32 %v440, 1.1283791
    %v442 = vmul.f32 %v383, %v441
    %v443 = vmul.f32 %v431, 3.8918573e-05
    %v444 = vadd.f32 %v443, 0.001143296
    %v445 = vmul.f32 %v431, %v444
    %v446 = vadd.f32 %v445, 0.014752088
    %v447 = vmul.f32 %v431, %v446
    %v448 = vadd.f32 %v447, 0.112945676
    %v449 = vmul.f32 %v431, %v448
    %v450 = vadd.f32 %v449, 0.4994258
    %v451 = vmul.f32 %v431, %v450
    %v452 = vadd.f32 %v451, 1.0
    %v453 = vrcp.pop %v452
    %v454 = vmul.f32 %v452, %v453
    %v455 = vsub.f32 1.0, %v454
    %v456 = vmul.f32 %v453, %v455
    %v457 = vadd.f32 %v453, %v456
    %vm458 = vweird.f32 %v452
    %vm459 = vweird.f32 %v453
    %vm460 = vmor %vm458, %vm459
    %v461 = vsel %vm460, %v453, %v457
    %v462 = vand.u32 2147483647, %v452
    %vm463 = vcmp.eq.f32.partialorder %v462, 8.507059e+37
    %v464 = vand.u32 %v452, 2147483648
    %v465 = vor.u32 1.1754944e-38, %v464
    %v466 = vsel %vm463, %v465, %v461
    %v467 = vmul.f32 %v442, %v466
    %v468 = vmin.f32 %v467, 1.0
    %v469 = vmax.f32 %v468, -1.0
    %v470 = vmul.f32 %v384, %v384
    %v471 = vmin.f32 16.0, %v470
    %v472 = vmul.f32 %v471, 2.1237322e-06
    %v473 = vadd.f32 %v472, 0.00028619796
    %v474 = vmul.f32 %v471, %v473
    %v475 = vadd.f32 %v474, 0.0036580483
    %v476 = vmul.f32 %v471, %v475
    %v477 = vadd.f32 %v476, 0.05243302
    %v478 = vmul.f32 %v471, %v477
    %v479 = vadd.f32 %v478, 0.18741608
    %v480 = vmul.f32 %v471, %v479
    %v481 = vadd.f32 %v480, 1.1283791
    %v482 = vmul.f32 %v384, %v481
    %v483 = vmul.f32 %v471, 3.8918573e-05
    %v484 = vadd.f32 %v483, 0.001143296
    %v485 = vmul.f32 %v471, %v484
    %v486 = vadd.f32 %v485, 0.014752088
    %v487 = vmul.f32 %v471, %v486
    %v488 = vadd.f32 %v487, 0.112945676
    %v489 = vmul.f32 %v471, %v488
    %v490 = vadd.f32 %v489, 0.4994258
    %v491 = vmul.f32 %v471, %v490
    %v492 = vadd.f32 %v491, 1.0
    %v493 = vrcp.pop %v492
    %v494 = vmul.f32 %v492, %v493
    %v495 = vsub.f32 1.0, %v494
    %v496 = vmul.f32 %v493, %v495
    %v497 = vadd.f32 %v493, %v496
    %vm498 = vweird.f32 %v492
    %vm499 = vweird.f32 %v493
    %vm500 = vmor %vm498, %vm499
    %v501 = vsel %vm500, %v493, %v497
    %v502 = vand.u32 2147483647, %v492
    %vm503 = vcmp.eq.f32.partialorder %v502, 8.507059e+37
    %v504 = vand.u32 %v492, 2147483648
    %v505 = vor.u32 1.1754944e-38, %v504
    %v506 = vsel %vm503, %v505, %v501
    %v507 = vmul.f32 %v482, %v506
    %v508 = vmin.f32 %v507, 1.0
    %v509 = vmax.f32 %v508, -1.0
    %v510 = vmul.f32 %v385, %v385
    %v511 = vmin.f32 16.0, %v510
    %v512 = vmul.f32 %v511, 2.1237322e-06
    %v513 = vadd.f32 %v512, 0.00028619796
    %v514 = vmul.f32 %v511, %v513
    %v515 = vadd.f32 %v514, 0.0036580483
    %v516 = vmul.f32 %v511, %v515
    %v517 = vadd.f32 %v516, 0.05243302
    %v518 = vmul.f32 %v511, %v517
    %v519 = vadd.f32 %v518, 0.18741608
    %v520 = vmul.f32 %v511, %v519
    %v521 = vadd.f32 %v520, 1.1283791
    %v522 = vmul.f32 %v385, %v521
    %v523 = vmul.f32 %v511, 3.8918573e-05
    %v524 = vadd.f32 %v523, 0.001143296
    %v525 = vmul.f32 %v511, %v524
    %v526 = vadd.f32 %v525, 0.014752088
    %v527 = vmul.f32 %v511, %v526
    %v528 = vadd.f32 %v527, 0.112945676
    %v529 = vmul.f32 %v511, %v528
    %v530 = vadd.f32 %v529, 0.4994258
    %v531 = vmul.f32 %v511, %v530
    %v532 = vadd.f32 %v531, 1.0
    %v533 = vrcp.pop %v532
    %v534 = vmul.f32 %v532, %v533
    %v535 = vsub.f32 1.0, %v534
    %v536 = vmul.f32 %v533, %v535
    %v537 = vadd.f32 %v533, %v536
    %vm538 = vweird.f32 %v532
    %vm539 = vweird.f32 %v533
    %vm540 = vmor %vm538, %vm539
    %v541 = vsel %vm540, %v533, %v537
    %v542 = vand.u32 2147483647, %v532
    %vm543 = vcmp.eq.f32.partialorder %v542, 8.507059e+37
    %v544 = vand.u32 %v532, 2147483648
    %v545 = vor.u32 1.1754944e-38, %v544
    %v546 = vsel %vm543, %v545, %v541
    %v547 = vmul.f32 %v522, %v546
    %v548 = vmin.f32 %v547, 1.0
    %v549 = vmax.f32 %v548, -1.0
    %v550 = vmul.f32 %v386, %v386
    %v551 = vmin.f32 16.0, %v550
    %v552 = vmul.f32 %v551, 2.1237322e-06
    %v553 = vadd.f32 %v552, 0.00028619796
    %v554 = vmul.f32 %v551, %v553
    %v555 = vadd.f32 %v554, 0.0036580483
    %v556 = vmul.f32 %v551, %v555
    %v557 = vadd.f32 %v556, 0.05243302
    %v558 = vmul.f32 %v551, %v557
    %v559 = vadd.f32 %v558, 0.18741608
    %v560 = vmul.f32 %v551, %v559
    %v561 = vadd.f32 %v560, 1.1283791
    %v562 = vmul.f32 %v386, %v561
    %v563 = vmul.f32 %v551, 3.8918573e-05
    %v564 = vadd.f32 %v563, 0.001143296
    %v565 = vmul.f32 %v551, %v564
    %v566 = vadd.f32 %v565, 0.014752088
    %v567 = vmul.f32 %v551, %v566
    %v568 = vadd.f32 %v567, 0.112945676
    %v569 = vmul.f32 %v551, %v568
    %v570 = vadd.f32 %v569, 0.4994258
    %v571 = vmul.f32 %v551, %v570
    %v572 = vadd.f32 %v571, 1.0
    %v573 = vrcp.pop %v572
    %v574 = vmul.f32 %v572, %v573
    %v575 = vsub.f32 1.0, %v574
    %v576 = vmul.f32 %v573, %v575
    %v577 = vadd.f32 %v573, %v576
    %vm578 = vweird.f32 %v572
    %vm579 = vweird.f32 %v573
    %vm580 = vmor %vm578, %vm579
    %v581 = vsel %vm580, %v573, %v577
    %v582 = vand.u32 2147483647, %v572
    %vm583 = vcmp.eq.f32.partialorder %v582, 8.507059e+37
    %v584 = vand.u32 %v572, 2147483648
    %v585 = vor.u32 1.1754944e-38, %v584
    %v586 = vsel %vm583, %v585, %v581
    %v587 = vmul.f32 %v562, %v586
    %v588 = vmin.f32 %v587, 1.0
    %v589 = vmax.f32 %v588, -1.0
    %v590 = vmul.f32 %v387, %v387
    %v591 = vmin.f32 16.0, %v590
    %v592 = vmul.f32 %v591, 2.1237322e-06
    %v593 = vadd.f32 %v592, 0.00028619796
    %v594 = vmul.f32 %v591, %v593
    %v595 = vadd.f32 %v594, 0.0036580483
    %v596 = vmul.f32 %v591, %v595
    %v597 = vadd.f32 %v596, 0.05243302
    %v598 = vmul.f32 %v591, %v597
    %v599 = vadd.f32 %v598, 0.18741608
    %v600 = vmul.f32 %v591, %v599
    %v601 = vadd.f32 %v600, 1.1283791
    %v602 = vmul.f32 %v387, %v601
    %v603 = vmul.f32 %v591, 3.8918573e-05
    %v604 = vadd.f32 %v603, 0.001143296
    %v605 = vmul.f32 %v591, %v604
    %v606 = vadd.f32 %v605, 0.014752088
    %v607 = vmul.f32 %v591, %v606
    %v608 = vadd.f32 %v607, 0.112945676
    %v609 = vmul.f32 %v591, %v608
    %v610 = vadd.f32 %v609, 0.4994258
    %v611 = vmul.f32 %v591, %v610
    %v612 = vadd.f32 %v611, 1.0
    %v613 = vrcp.pop %v612
    %v614 = vmul.f32 %v612, %v613
    %v615 = vsub.f32 1.0, %v614
    %v616 = vmul.f32 %v613, %v615
    %v617 = vadd.f32 %v613, %v616
    %vm618 = vweird.f32 %v612
    %vm619 = vweird.f32 %v613
    %vm620 = vmor %vm618, %vm619
    %v621 = vsel %vm620, %v613, %v617
    %v622 = vand.u32 2147483647, %v612
    %vm623 = vcmp.eq.f32.partialorder %v622, 8.507059e+37
    %v624 = vand.u32 %v612, 2147483648
    %v625 = vor.u32 1.1754944e-38, %v624
    %v626 = vsel %vm623, %v625, %v621
    %v627 = vmul.f32 %v602, %v626
    %v628 = vmin.f32 %v627, 1.0
    %v629 = vmax.f32 %v628, -1.0
    %v630 = vmul.f32 %v388, %v388
    %v631 = vmin.f32 16.0, %v630
    %v632 = vmul.f32 %v631, 2.1237322e-06
    %v633 = vadd.f32 %v632, 0.00028619796
    %v634 = vmul.f32 %v631, %v633
    %v635 = vadd.f32 %v634, 0.0036580483
    %v636 = vmul.f32 %v631, %v635
    %v637 = vadd.f32 %v636, 0.05243302
    %v638 = vmul.f32 %v631, %v637
    %v639 = vadd.f32 %v638, 0.18741608
    %v640 = vmul.f32 %v631, %v639
    %v641 = vadd.f32 %v640, 1.1283791
    %v642 = vmul.f32 %v388, %v641
    %v643 = vmul.f32 %v631, 3.8918573e-05
    %v644 = vadd.f32 %v643, 0.001143296
    %v645 = vmul.f32 %v631, %v644
    %v646 = vadd.f32 %v645, 0.014752088
    %v647 = vmul.f32 %v631, %v646
    %v648 = vadd.f32 %v647, 0.112945676
    %v649 = vmul.f32 %v631, %v648
    %v650 = vadd.f32 %v649, 0.4994258
    %v651 = vmul.f32 %v631, %v650
    %v652 = vadd.f32 %v651, 1.0
    %v653 = vrcp.pop %v652
    %v654 = vmul.f32 %v652, %v653
    %v655 = vsub.f32 1.0, %v654
    %v656 = vmul.f32 %v653, %v655
    %v657 = vadd.f32 %v653, %v656
    %vm658 = vweird.f32 %v652
    %vm659 = vweird.f32 %v653
    %vm660 = vmor %vm658, %vm659
    %v661 = vsel %vm660, %v653, %v657
    %v662 = vand.u32 2147483647, %v652
    %vm663 = vcmp.eq.f32.partialorder %v662, 8.507059e+37
    %v664 = vand.u32 %v652, 2147483648
    %v665 = vor.u32 1.1754944e-38, %v664
    %v666 = vsel %vm663, %v665, %v661
    %v667 = vmul.f32 %v642, %v666
    %v668 = vmin.f32 %v667, 1.0
    %v669 = vmax.f32 %v668, -1.0
    %v670 = vmul.f32 %v389, %v389
    %v671 = vmin.f32 16.0, %v670
    %v672 = vmul.f32 %v671, 2.1237322e-06
    %v673 = vadd.f32 %v672, 0.00028619796
    %v674 = vmul.f32 %v671, %v673
    %v675 = vadd.f32 %v674, 0.0036580483
    %v676 = vmul.f32 %v671, %v675
    %v677 = vadd.f32 %v676, 0.05243302
    %v678 = vmul.f32 %v671, %v677
    %v679 = vadd.f32 %v678, 0.18741608
    %v680 = vmul.f32 %v671, %v679
    %v681 = vadd.f32 %v680, 1.1283791
    %v682 = vmul.f32 %v389, %v681
    %v683 = vmul.f32 %v671, 3.8918573e-05
    %v684 = vadd.f32 %v683, 0.001143296
    %v685 = vmul.f32 %v671, %v684
    %v686 = vadd.f32 %v685, 0.014752088
    %v687 = vmul.f32 %v671, %v686
    %v688 = vadd.f32 %v687, 0.112945676
    %v689 = vmul.f32 %v671, %v688
    %v690 = vadd.f32 %v689, 0.4994258
    %v691 = vmul.f32 %v671, %v690
    %v692 = vadd.f32 %v691, 1.0
    %v693 = vrcp.pop %v692
    %v694 = vmul.f32 %v692, %v693
    %v695 = vsub.f32 1.0, %v694
    %v696 = vmul.f32 %v693, %v695
    %v697 = vadd.f32 %v693, %v696
    %vm698 = vweird.f32 %v692
    %vm699 = vweird.f32 %v693
    %vm700 = vmor %vm698, %vm699
    %v701 = vsel %vm700, %v693, %v697
    %v702 = vand.u32 2147483647, %v692
    %vm703 = vcmp.eq.f32.partialorder %v702, 8.507059e+37
    %v704 = vand.u32 %v692, 2147483648
    %v705 = vor.u32 1.1754944e-38, %v704
    %v706 = vsel %vm703, %v705, %v701
    %v707 = vmul.f32 %v682, %v706
    %v708 = vmin.f32 %v707, 1.0
    %v709 = vmax.f32 %v708, -1.0
    %v710 = vadd.f32 %v429, 1.0
    %v711 = vadd.f32 %v469, 1.0
    %v712 = vadd.f32 %v509, 1.0
    %v713 = vadd.f32 %v549, 1.0
    %v714 = vadd.f32 %v589, 1.0
    %v715 = vadd.f32 %v629, 1.0
    %v716 = vadd.f32 %v669, 1.0
    %v717 = vadd.f32 %v709, 1.0
    %v718 = vmul.f32 %v374, %v710
    %v719 = vmul.f32 %v375, %v711
    %v720 = vmul.f32 %v376, %v712
    %v721 = vmul.f32 %v377, %v713
    %v722 = vmul.f32 %v378, %v714
    %v723 = vmul.f32 %v379, %v715
    %v724 = vmul.f32 %v380, %v716
    %v725 = vmul.f32 %v381, %v717
    %v726 = vld [vmem:[#allocation3] sm:$0xff]
    %v727 = vld [vmem:[#allocation3 + $0x8] sm:$0xff]
    %v728 = vpack.c.bf16 %v722, %v718
    %v729 = vpack.c.bf16 %v723, %v719
    %v730 = vpack.c.bf16 %v724, %v720
    %v731 = vpack.c.bf16 %v725, %v721
    %v732 = vld [vmem:[#allocation12] sm:$0xf]
    %v733 = vld [vmem:[#allocation12 + $0x4] sm:$0xf]
    %v734 = vld [vmem:[#allocation12 + $0x8] sm:$0xf]
    %v735 = vld [vmem:[#allocation12 + $0xc] sm:$0xf]
    %v736 = vld [vmem:[#allocation12 + $0x10] sm:$0xf]
    %v737 = vld [vmem:[#allocation12 + $0x14] sm:$0xf]
    %v738 = vld [vmem:[#allocation12 + $0x18] sm:$0xf]
    %v739 = vld [vmem:[#allocation12 + $0x1c] sm:$0xf]
    %v740 = vld [vmem:[#allocation12 + $0x20] sm:$0xf]
    %v741 = vld [vmem:[#allocation12 + $0x24] sm:$0xf]
    %v742 = vld [vmem:[#allocation12 + $0x28] sm:$0xf]
    %v743 = vld [vmem:[#allocation12 + $0x2c] sm:$0xf]
    %v744 = vld [vmem:[#allocation12 + $0x30] sm:$0xf]
    %v745 = vld [vmem:[#allocation12 + $0x34] sm:$0xf]
    %v746 = vld [vmem:[#allocation12 + $0x38] sm:$0xf]
    %v747 = vld [vmem:[#allocation12 + $0x3c] sm:$0xf]
    %v748 = vld [vmem:[#allocation12 + $0x40] sm:$0xf]
    %v749 = vld [vmem:[#allocation12 + $0x44] sm:$0xf]
    %v750 = vld [vmem:[#allocation12 + $0x48] sm:$0xf]
    %v751 = vld [vmem:[#allocation12 + $0x4c] sm:$0xf]
    %v752 = vld [vmem:[#allocation12 + $0x50] sm:$0xf]
    %v753 = vld [vmem:[#allocation12 + $0x54] sm:$0xf]
    %v754 = vld [vmem:[#allocation12 + $0x58] sm:$0xf]
    %v755 = vld [vmem:[#allocation12 + $0x5c] sm:$0xf]
    %v756 = vld [vmem:[#allocation12 + $0x60] sm:$0xf]
    %v757 = vld [vmem:[#allocation12 + $0x64] sm:$0xf]
    %v758 = vld [vmem:[#allocation12 + $0x68] sm:$0xf]
    %v759 = vld [vmem:[#allocation12 + $0x6c] sm:$0xf]
    %v760 = vld [vmem:[#allocation12 + $0x70] sm:$0xf]
    %v761 = vld [vmem:[#allocation12 + $0x74] sm:$0xf]
    %v762 = vld [vmem:[#allocation12 + $0x78] sm:$0xf]
    %v763 = vld [vmem:[#allocation12 + $0x7c] sm:$0xf]
    %v764 = vld [vmem:[#allocation12 + $0x80] sm:$0xf]
    %v765 = vld [vmem:[#allocation12 + $0x84] sm:$0xf]
    %v766 = vld [vmem:[#allocation12 + $0x88] sm:$0xf]
    %v767 = vld [vmem:[#allocation12 + $0x8c] sm:$0xf]
    %v768 = vld [vmem:[#allocation12 + $0x90] sm:$0xf]
    %v769 = vld [vmem:[#allocation12 + $0x94] sm:$0xf]
    %v770 = vld [vmem:[#allocation12 + $0x98] sm:$0xf]
    %v771 = vld [vmem:[#allocation12 + $0x9c] sm:$0xf]
    %v772 = vld [vmem:[#allocation12 + $0xa0] sm:$0xf]
    %v773 = vld [vmem:[#allocation12 + $0xa4] sm:$0xf]
    %v774 = vld [vmem:[#allocation12 + $0xa8] sm:$0xf]
    %v775 = vld [vmem:[#allocation12 + $0xac] sm:$0xf]
    %v776 = vld [vmem:[#allocation12 + $0xb0] sm:$0xf]
    %v777 = vld [vmem:[#allocation12 + $0xb4] sm:$0xf]
    %v778 = vld [vmem:[#allocation12 + $0xb8] sm:$0xf]
    %v779 = vld [vmem:[#allocation12 + $0xbc] sm:$0xf]
    %v780 = vld [vmem:[#allocation12 + $0xc0] sm:$0xf]
    %v781 = vld [vmem:[#allocation12 + $0xc4] sm:$0xf]
    %v782 = vld [vmem:[#allocation12 + $0xc8] sm:$0xf]
    %v783 = vld [vmem:[#allocation12 + $0xcc] sm:$0xf]
    %v784 = vld [vmem:[#allocation12 + $0xd0] sm:$0xf]
    %v785 = vld [vmem:[#allocation12 + $0xd4] sm:$0xf]
    %v786 = vld [vmem:[#allocation12 + $0xd8] sm:$0xf]
    %v787 = vld [vmem:[#allocation12 + $0xdc] sm:$0xf]
    %v788 = vld [vmem:[#allocation12 + $0xe0] sm:$0xf]
    %v789 = vld [vmem:[#allocation12 + $0xe4] sm:$0xf]
    %v790 = vld [vmem:[#allocation12 + $0xe8] sm:$0xf]
    %v791 = vld [vmem:[#allocation12 + $0xec] sm:$0xf]
    %v792 = vld [vmem:[#allocation12 + $0xf0] sm:$0xf]
    %v793 = vld [vmem:[#allocation12 + $0xf4] sm:$0xf]
    %v794 = vld [vmem:[#allocation12 + $0xf8] sm:$0xf]
    %v795 = vld [vmem:[#allocation12 + $0xfc] sm:$0xf]
    %v860 = vunpack.c.l.b16 %v732
    %v861 = vunpack.c.l.b16 %v733
    %v862 = vunpack.c.l.b16 %v734
    %v863 = vunpack.c.l.b16 %v735
    %v864 = vunpack.c.l.b16 %v736
    %v865 = vunpack.c.l.b16 %v737
    %v866 = vunpack.c.l.b16 %v738
    %v867 = vunpack.c.l.b16 %v739
    %v868 = vunpack.c.l.b16 %v740
    %v869 = vunpack.c.l.b16 %v741
    %v870 = vunpack.c.l.b16 %v742
    %v871 = vunpack.c.l.b16 %v743
    %v872 = vunpack.c.l.b16 %v744
    %v873 = vunpack.c.l.b16 %v745
    %v874 = vunpack.c.l.b16 %v746
    %v875 = vunpack.c.l.b16 %v747
    %v876 = vunpack.c.l.b16 %v748
    %v877 = vunpack.c.l.b16 %v749
    %v878 = vunpack.c.l.b16 %v750
    %v879 = vunpack.c.l.b16 %v751
    %v880 = vunpack.c.l.b16 %v752
    %v881 = vunpack.c.l.b16 %v753
    %v882 = vunpack.c.l.b16 %v754
    %v883 = vunpack.c.l.b16 %v755
    %v884 = vunpack.c.l.b16 %v756
    %v885 = vunpack.c.l.b16 %v757
    %v886 = vunpack.c.l.b16 %v758
    %v887 = vunpack.c.l.b16 %v759
    %v888 = vunpack.c.l.b16 %v760
    %v889 = vunpack.c.l.b16 %v761
    %v890 = vunpack.c.l.b16 %v762
    %v891 = vunpack.c.l.b16 %v763
    %v892 = vunpack.c.l.b16 %v764
    %v893 = vunpack.c.l.b16 %v765
    %v894 = vunpack.c.l.b16 %v766
    %v895 = vunpack.c.l.b16 %v767
    %v896 = vunpack.c.l.b16 %v768
    %v897 = vunpack.c.l.b16 %v769
    %v898 = vunpack.c.l.b16 %v770
    %v899 = vunpack.c.l.b16 %v771
    %v900 = vunpack.c.l.b16 %v772
    %v901 = vunpack.c.l.b16 %v773
    %v902 = vunpack.c.l.b16 %v774
    %v903 = vunpack.c.l.b16 %v775
    %v904 = vunpack.c.l.b16 %v776
    %v905 = vunpack.c.l.b16 %v777
    %v906 = vunpack.c.l.b16 %v778
    %v907 = vunpack.c.l.b16 %v779
    %v908 = vunpack.c.l.b16 %v780
    %v909 = vunpack.c.l.b16 %v781
    %v910 = vunpack.c.l.b16 %v782
    %v911 = vunpack.c.l.b16 %v783
    %v912 = vunpack.c.l.b16 %v784
    %v913 = vunpack.c.l.b16 %v785
    %v914 = vunpack.c.l.b16 %v786
    %v915 = vunpack.c.l.b16 %v787
    %v916 = vunpack.c.l.b16 %v788
    %v917 = vunpack.c.l.b16 %v789
    %v918 = vunpack.c.l.b16 %v790
    %v919 = vunpack.c.l.b16 %v791
    %v920 = vunpack.c.l.b16 %v792
    %v921 = vunpack.c.l.b16 %v793
    %v922 = vunpack.c.l.b16 %v794
    %v923 = vunpack.c.l.b16 %v795
    %v924 = vpack.c.b16 %v861, %v860
    %v925 = vpack.c.b16 %v863, %v862
    %v926 = vpack.c.b16 %v865, %v864
    %v927 = vpack.c.b16 %v867, %v866
    %v928 = vpack.c.b16 %v869, %v868
    %v929 = vpack.c.b16 %v871, %v870
    %v930 = vpack.c.b16 %v873, %v872
    %v931 = vpack.c.b16 %v875, %v874
    %v932 = vpack.c.b16 %v877, %v876
    %v933 = vpack.c.b16 %v879, %v878
    %v934 = vpack.c.b16 %v881, %v880
    %v935 = vpack.c.b16 %v883, %v882
    %v936 = vpack.c.b16 %v885, %v884
    %v937 = vpack.c.b16 %v887, %v886
    %v938 = vpack.c.b16 %v889, %v888
    %v939 = vpack.c.b16 %v891, %v890
    %v940 = vpack.c.b16 %v893, %v892
    %v941 = vpack.c.b16 %v895, %v894
    %v942 = vpack.c.b16 %v897, %v896
    %v943 = vpack.c.b16 %v899, %v898
    %v944 = vpack.c.b16 %v901, %v900
    %v945 = vpack.c.b16 %v903, %v902
    %v946 = vpack.c.b16 %v905, %v904
    %v947 = vpack.c.b16 %v907, %v906
    %v948 = vpack.c.b16 %v909, %v908
    %v949 = vpack.c.b16 %v911, %v910
    %v950 = vpack.c.b16 %v913, %v912
    %v951 = vpack.c.b16 %v915, %v914
    %v952 = vpack.c.b16 %v917, %v916
    %v953 = vpack.c.b16 %v919, %v918
    %v954 = vpack.c.b16 %v921, %v920
    %v955 = vpack.c.b16 %v923, %v922
    %988 = vmatpush.bf16.msra.mxu0 %v931
    %989 = vmatpush.bf16.msra.mxu0 %v930
    %990 = vmatpush.bf16.msra.mxu0 %v929
    %991 = vmatpush.bf16.msra.mxu0 %v928
    %992 = vmatpush.bf16.msra.mxu0 %v927
    %993 = vmatpush.bf16.msra.mxu0 %v926
    %994 = vmatpush.bf16.msra.mxu0 %v925
    %995 = vmatpush.bf16.msra.mxu0 %v924
    %996 = vmatmul.bf16.gmra.mxu0 %v728
    %v997 = vpop.f32.mrf.mxu0
    %v998 = vadd.f32 0.0, %v997
    %v999 = vpop.f32.mrf.mxu0
    %v1000 = vadd.f32 0.0, %v999
    %1001 = vdwg.mxu0
    %1002 = vmatpush.bf16.msra.mxu0 %v939
    %1003 = vmatpush.bf16.msra.mxu0 %v938
    %1004 = vmatpush.bf16.msra.mxu0 %v937
    %1005 = vmatpush.bf16.msra.mxu0 %v936
    %1006 = vmatpush.bf16.msra.mxu0 %v935
    %1007 = vmatpush.bf16.msra.mxu0 %v934
    %1008 = vmatpush.bf16.msra.mxu0 %v933
    %1009 = vmatpush.bf16.msra.mxu0 %v932
    %1010 = vmatmul.bf16.gmra.mxu0 %v729
    %v1011 = vpop.f32.mrf.mxu0
    %v1012 = vadd.f32 %v998, %v1011
    %v1013 = vpop.f32.mrf.mxu0
    %v1014 = vadd.f32 %v1000, %v1013
    %1015 = vdwg.mxu0
    %1016 = vmatpush.bf16.msra.mxu0 %v947
    %1017 = vmatpush.bf16.msra.mxu0 %v946
    %1018 = vmatpush.bf16.msra.mxu0 %v945
    %1019 = vmatpush.bf16.msra.mxu0 %v944
    %1020 = vmatpush.bf16.msra.mxu0 %v943
    %1021 = vmatpush.bf16.msra.mxu0 %v942
    %1022 = vmatpush.bf16.msra.mxu0 %v941
    %1023 = vmatpush.bf16.msra.mxu0 %v940
    %1024 = vmatmul.bf16.gmra.mxu0 %v730
    %v1025 = vpop.f32.mrf.mxu0
    %v1026 = vadd.f32 %v1012, %v1025
    %v1027 = vpop.f32.mrf.mxu0
    %v1028 = vadd.f32 %v1014, %v1027
    %1029 = vdwg.mxu0
    %1030 = vmatpush.bf16.msra.mxu0 %v955
    %1031 = vmatpush.bf16.msra.mxu0 %v954
    %1032 = vmatpush.bf16.msra.mxu0 %v953
    %1033 = vmatpush.bf16.msra.mxu0 %v952
    %1034 = vmatpush.bf16.msra.mxu0 %v951
    %1035 = vmatpush.bf16.msra.mxu0 %v950
    %1036 = vmatpush.bf16.msra.mxu0 %v949
    %1037 = vmatpush.bf16.msra.mxu0 %v948
    %1038 = vmatmul.bf16.gmra.mxu0 %v731
    %v1039 = vpop.f32.mrf.mxu0
    %v1040 = vadd.f32 %v1026, %v1039
    %v1041 = vpop.f32.mrf.mxu0
    %v1042 = vadd.f32 %v1028, %v1041
    %1043 = vdwg.mxu0
    %v1044 = vadd.f32 %v726, %v1040
    %v1045 = vadd.f32 %v727, %v1042
    %1046 = vst [vmem:[#allocation3] sm:$0xff] %v1044
    %1047 = vst [vmem:[#allocation3 + $0x8] sm:$0xff] %v1045
    // Predicated region
    $region46: #{tpu_custom_call.1} parent=1 // pred_check
      %p1048 = pneg %p95
    $region47: #{tpu_custom_call.1} parent=1 // pred_check_branch
      %1050 = sbr.rel (%p1048) target = $region49
    $region48: #{tpu_custom_call.1} parent=1 // pred_region
      %v1051 = vld [vmem:[#allocation3] sm:$0xff]
      %v1052 = vld [vmem:[#allocation3 + $0x8] sm:$0xff]
      %v1053 = vld [vmem:[#allocation7 + $0x4] sm:$0x1]
      %v1054 = vperm.slane %v1053, 0
      %v1055 = vadd.f32 %v1051, %v1054
      %v1056 = vadd.f32 %v1052, %v1054
      %v1057 = vld [vmem:[#allocation7 + $0x2] sm:$0x1]
      %v1058 = vperm.slane %v1057, 0
      %v1059 = vmul.f32 %v1058, %v1055
      %v1060 = vmul.f32 %v1058, %v1056
      %v1061 = vld [vmem:[#allocation7 + $0x3] sm:$0x1]
      %v1062 = vperm.slane %v1061, 0
      %v1063 = vadd.f32 %v1059, %v1062
      %v1064 = vadd.f32 %v1060, %v1062
      %v1065 = vld [vmem:[#allocation2] sm:$0xff]
      %v1066 = vld [vmem:[#allocation2 + $0x8] sm:$0xff]
      %v1067 = vadd.f32 %v1063, %v1065
      %v1068 = vadd.f32 %v1064, %v1066
      %1069 = vst [vmem:[#allocation13] sm:$0xff] %v1067
      %1070 = vst [vmem:[#allocation13 + $0x8] sm:$0xff] %v1068
    $region49: #{tpu_custom_call.1} parent=1 // pred_fallthru
      _
    // Predicated region
    $region50: #{tpu_custom_call.1} parent=1 // pred_check
      _
    $region51: #{tpu_custom_call.1} parent=1 // pred_check_branch
      %1072 = sbr.rel (0) target = $region53
    $region52: #{tpu_custom_call.1} parent=1 // pred_region
      %1074 = vsyncadd [#allocation6], 0
      %s1075 = sshll.u32 [#allocation13], 4
      %s1076 = int_to_ptr.vmem [resolvable:$true] %s1075
      %s1077 = sshll.u32 %s5, 4
      %s1078 = int_to_ptr.hbm [resolvable:$true] %s1077
      %1083 = dma.vmem_to_hbm [thread:$0]  %s1076, 256, %s1078, [#allocation6], 128, 128, 8
    $region53: #{tpu_custom_call.1} parent=1 // pred_fallthru
      _
    // Predicated region
    $region54: #{tpu_custom_call.1} parent=1 // pred_check
      _
    $region55: #{tpu_custom_call.1} parent=1 // pred_check_branch
      %1085 = sbr.rel (0) target = $region57
    $region56: #{tpu_custom_call.1} parent=1 // pred_region
      %1087 = dma.done [#allocation6], 256
    $region57: #{tpu_custom_call.1} parent=1 // pred_fallthru
      _
    %1088 = vsyncpa [#allocation5], 1
    %1089 = vsyncpa [#allocation8], 1
    %1090 = vsyncpa [#allocation11], 1
    %1091 = vsyncpa [#allocation6], 1

</llo_original>
